<compile_context>
chip_gen: v5e
topology: v5e:2x2
jax: 0.10.0
libtpu: 0.0.40
codegen_flags: <defaults>
</compile_context>

<pallas_src>
import functools

import jax
import jax.numpy as jnp
from jax.experimental import pallas as pl
from jax.experimental.pallas import tpu as pltpu


def _round_up(n: int, m: int) -> int:
    return (n + m - 1) // m * m


# ----------------------------------------------------------------------------
# Kernel body.  Grid = (row_tiles, h_tiles); the H axis is a reduction for the
# second matmul and is accumulated in an f32 VMEM scratch.
# ----------------------------------------------------------------------------
def _ffn_kernel(x_ref, w1_ref, b1_ref, w2_ref, b2_ref, o_ref, acc_ref, *,
                bf16_epilogue: bool):
    h_step = pl.program_id(1)

    @pl.when(h_step == 0)
    def _():
        acc_ref[...] = jnp.zeros_like(acc_ref)

    # x tile is DMA'd in its stored dtype; cast to bf16 for the MXU here.
    x = x_ref[...].astype(jnp.bfloat16)

    # Linear1 chunk on the MXU (bf16 operands, f32 accumulation).
    h = jnp.dot(x, w1_ref[...], preferred_element_type=jnp.float32)

    if bf16_epilogue:
        # v6e/v7x: bf16 VPU/EUP -> do bias + Swish in bf16 (halves epilogue
        # VMEM/vreg traffic; second matmul wants bf16 operands anyway).
        hb = h.astype(jnp.bfloat16) + b1_ref[...].astype(jnp.bfloat16)
        hb = hb * jax.nn.sigmoid(hb)
    else:
        # v5e and older: keep the epilogue in f32.
        hf = h + b1_ref[...]
        hb = (hf * jax.nn.sigmoid(hf)).astype(jnp.bfloat16)

    # Dropout -> identity (inference).

    # Linear2 chunk, accumulated over the H grid axis in f32.
    acc_ref[...] += jnp.dot(hb, w2_ref[...], preferred_element_type=jnp.float32)

    @pl.when(h_step == pl.num_programs(1) - 1)
    def _():
        o_ref[...] = (acc_ref[...] + b2_ref[...]).astype(o_ref.dtype)


# ----------------------------------------------------------------------------
# Parameter preparation (run once, outside the hot path).
# ----------------------------------------------------------------------------
def prepare_ffn_params(w1, b1, w2, b2):
    """Pad feature dims to multiples of 128 and cast weights to bf16 once."""
    D, H = w1.shape
    assert w2.shape == (H, D) and b1.shape == (H,) and b2.shape == (D,)
    Dp = _round_up(D, 128)
    Hp = _round_up(H, 128)
    w1p = jnp.pad(w1, ((0, Dp - D), (0, Hp - H))).astype(jnp.bfloat16)
    w2p = jnp.pad(w2, ((0, Hp - H), (0, Dp - D))).astype(jnp.bfloat16)
    b1p = jnp.pad(b1, (0, Hp - H)).reshape(1, Hp).astype(jnp.float32)
    b2p = jnp.pad(b2, (0, Dp - D)).reshape(1, Dp).astype(jnp.float32)
    return {"w1": w1p, "b1": b1p, "w2": w2p, "b2": b2p, "dim": D, "hidden": H}


# ----------------------------------------------------------------------------
# Hardware-aware tiling / VMEM budgeting (trace-time, pure Python).
# ----------------------------------------------------------------------------
def _tpu_vmem_capacity_bytes() -> int:
    try:
        return int(pltpu.get_tpu_info().vmem_capacity_bytes)
    except Exception:
        pass
    try:
        kind = jax.devices()[0].device_kind.lower()
        if "v5" in kind or "v6" in kind:
            return 128 * 1024 * 1024
    except Exception:
        pass
    return 64 * 1024 * 1024  # conservative (v7x per-TensorCore)


def _bf16_epilogue_supported() -> bool:
    try:
        kind = jax.devices()[0].device_kind.lower()
        # v2-v5 have no bf16 VPU/EUP; keep the f32 epilogue there.
        return not any(g in kind for g in ("v2", "v3", "v4", "v5"))
    except Exception:
        return False


def _vmem_need_bytes(tm, th, Dp, x_bytes, out_bytes) -> int:
    need = 2 * tm * Dp * x_bytes            # input tiles (double-buffered)
    need += 2 * tm * Dp * out_bytes         # output tiles (double-buffered)
    need += 2 * 2 * Dp * th * 2             # W1 + W2 chunks (bf16, double-buffered)
    need += 2 * 8 * th * 4 + 2 * 8 * Dp * 4  # biases (sublane-padded)
    need += tm * Dp * 4                     # f32 accumulator scratch
    need += 2 * tm * th * 4                 # hidden activation / compiler temps
    return need


def _h_tile_candidates(Hp):
    """Divisors of Hp that are multiples of 128, descending (Hp first)."""
    k = Hp // 128
    return [128 * d for d in range(k, 0, -1) if k % d == 0]


def _select_tiling(M, Dp, Hp, x_bytes, out_bytes, vmem_cap, tm_pref):
    budget = vmem_cap - (8 << 20)           # headroom for compiler internals
    h_cands = _h_tile_candidates(Hp)

    tm0 = max(8, min(tm_pref, _round_up(M, 8)))
    while True:
        n_tiles = -(-M // tm0)
        tm = _round_up(-(-M // n_tiles), 8)  # balanced tile -> <8 wasted rows/tile
        for th in h_cands:
            if _vmem_need_bytes(tm, th, Dp, x_bytes, out_bytes) <= budget:
                return tm, th
        if tm0 <= 8:
            return tm, h_cands[-1]
        tm0 = max(8, _round_up(tm0 // 2, 8))


# ----------------------------------------------------------------------------
# Jitted implementation.
# ----------------------------------------------------------------------------
@functools.partial(jax.jit,
                   static_argnames=("tm", "th", "bf16_epilogue", "vmem_limit"))
def _ffn_impl(x, w1p, b1p, w2p, b2p, *, tm, th, bf16_epilogue, vmem_limit):
    B, T, D = x.shape
    Dp, Hp = w1p.shape
    M = B * T

    n_row_tiles = -(-M // tm)
    Mp = tm * n_row_tiles

    x2d = x.reshape(M, D)
    pad_rows, pad_cols = Mp - M, Dp - D
    if pad_rows or pad_cols:
        # One fused pad+cast pass (only when padding is unavoidable).
        x2d = jnp.pad(x2d, ((0, pad_rows), (0, pad_cols))).astype(jnp.bfloat16)
    # else: no pre-pass at all; the kernel casts the DMA'd tile to bf16.

    grid = (n_row_tiles, Hp // th)
    kernel = functools.partial(_ffn_kernel, bf16_epilogue=bf16_epilogue)

    flops = 4 * Mp * Dp * Hp                 # two matmuls
    bytes_accessed = (x2d.size * x2d.dtype.itemsize
                      + w1p.size * 2 + w2p.size * 2
                      + b1p.size * 4 + b2p.size * 4
                      + Mp * Dp * jnp.dtype(x.dtype).itemsize)
    cost = pl.CostEstimate(flops=flops, transcendentals=Mp * Hp,
                           bytes_accessed=bytes_accessed)

    out2d = pl.pallas_call(
        kernel,
        out_shape=jax.ShapeDtypeStruct((Mp, Dp), x.dtype),
        grid_spec=pltpu.PrefetchScalarGridSpec(
            num_scalar_prefetch=0,
            grid=grid,
            in_specs=[
                pl.BlockSpec((tm, Dp), lambda i, h: (i, 0)),   # x rows tile
                pl.BlockSpec((Dp, th), lambda i, h: (0, h)),   # W1 chunk
                pl.BlockSpec((1, th), lambda i, h: (0, h)),    # b1 chunk
                pl.BlockSpec((th, Dp), lambda i, h: (h, 0)),   # W2 chunk
                pl.BlockSpec((1, Dp), lambda i, h: (0, 0)),    # b2
            ],
            out_specs=pl.BlockSpec((tm, Dp), lambda i, h: (i, 0)),
            scratch_shapes=[pltpu.VMEM((tm, Dp), jnp.float32)],
        ),
        compiler_params=pltpu.CompilerParams(
            dimension_semantics=("parallel", "arbitrary"),
            vmem_limit_bytes=vmem_limit,
        ),
        cost_estimate=cost,
    )(x2d, w1p, b1p, w2p, b2p)

    if pad_rows or pad_cols:
        out2d = out2d[:M, :D]
    return out2d.reshape(B, T, D)


def feed_forward_module(x, params, *, tm=512):
    """Squeezeformer FFN forward (inference).  x: (B, T, D) -> (B, T, D)."""
    B, T, D = x.shape
    assert D == params["dim"], "feature dim mismatch vs prepared params"
    w1p, b1p, w2p, b2p = params["w1"], params["b1"], params["w2"], params["b2"]
    Dp, Hp = w1p.shape
    M = B * T

    x_bytes = jnp.dtype(x.dtype).itemsize
    out_bytes = x_bytes
    vmem_cap = _tpu_vmem_capacity_bytes()
    tm_eff, th = _select_tiling(M, Dp, Hp, x_bytes, out_bytes, vmem_cap, tm)
    need = _vmem_need_bytes(tm_eff, th, Dp, x_bytes, out_bytes)
    vmem_limit = int(min(vmem_cap, max(need + (16 << 20), 32 << 20)))

    return _ffn_impl(x, w1p, b1p, w2p, b2p,
                     tm=tm_eff, th=th,
                     bf16_epilogue=_bf16_epilogue_supported(),
                     vmem_limit=vmem_limit)


def _reference(x, w1, b1, w2, b2):
    h = x @ w1 + b1
    h = h * jax.nn.sigmoid(h)
    return h @ w2 + b2


if __name__ == "__main__":
    # Small shapes: batch=2, time=8, encoder_dim=32, expansion_factor=4 -> H=128
    B, T, D, EXP = 2, 8, 32, 4
    H = D * EXP

    key = jax.random.PRNGKey(0)
    kx, k1, k2, k3, k4 = jax.random.split(key, 5)

    x = jax.random.normal(kx, (B, T, D), dtype=jnp.float32)

    # Deterministic parameter init (PyTorch-Linear-like scale 1/sqrt(fan_in)).
    bound1 = 1.0 / (D ** 0.5)
    bound2 = 1.0 / (H ** 0.5)
    w1 = jax.random.uniform(k1, (D, H), jnp.float32, -bound1, bound1)
    b1 = jax.random.uniform(k2, (H,), jnp.float32, -bound1, bound1)
    w2 = jax.random.uniform(k3, (H, D), jnp.float32, -bound2, bound2)
    b2 = jax.random.uniform(k4, (D,), jnp.float32, -bound2, bound2)

    # Pad/cast the parameters once (outside the per-call hot path).
    params = prepare_ffn_params(w1, b1, w2, b2)

    out = feed_forward_module(x, params)
    out = jax.block_until_ready(out)

    ref = _reference(x, w1, b1, w2, b2)
    assert out.shape == (B, T, D)
    assert out.dtype == x.dtype
    # bf16 matmul operands with f32 accumulation -> looser tolerance than pure f32.
    assert jnp.allclose(out, ref, atol=3e-2, rtol=3e-2), "mismatch vs reference"

    print("KERNEL_OK")
</pallas_src>

<mosaic_0001>
module attributes {stable_mosaic.version = 11 : i64} {
  func.func @_ffn_kernel(%arg0: i32, %arg1: i32, %arg2: memref<16x128xbf16, #tpu.memory_space<vmem>>, %arg3: memref<128x128xbf16, #tpu.memory_space<vmem>>, %arg4: memref<1x128xf32, #tpu.memory_space<vmem>>, %arg5: memref<128x128xbf16, #tpu.memory_space<vmem>>, %arg6: memref<1x128xf32, #tpu.memory_space<vmem>>, %arg7: memref<16x128xf32, #tpu.memory_space<vmem>>, %arg8: memref<16x128xf32, #tpu.memory_space<vmem>>) attributes {dimension_semantics = [#tpu.dimension_semantics<parallel>, #tpu.dimension_semantics<arbitrary>], iteration_bounds = array<i64: 1, 1>, scalar_prefetch = 0 : i64, scratch_operands = 1 : i64, tpu.core_type = #tpu.core_type<tc>, window_params = [{transform_indices = @transform_0, window_bounds = array<i64: 16, 128>}, {transform_indices = @transform_1, window_bounds = array<i64: 128, 128>}, {transform_indices = @transform_2, window_bounds = array<i64: 1, 128>}, {transform_indices = @transform_3, window_bounds = array<i64: 128, 128>}, {pipeline_mode = #tpu.pipeline_mode<synchronous>, transform_indices = @transform_4, window_bounds = array<i64: 1, 128>}, {transform_indices = @transform_5, window_bounds = array<i64: 16, 128>}]} {
    %c0_i32 = arith.constant 0 : i32
    %0 = arith.cmpi eq, %arg1, %c0_i32 : i32
    %1 = arith.extui %0 : i1 to i32
    %c0_i32_0 = arith.constant 0 : i32
    %2 = arith.cmpi ne, %1, %c0_i32_0 : i32
    scf.if %2 {
      %cst_16 = arith.constant 0.000000e+00 : f32
      %25 = vector.broadcast %cst_16 : f32 to vector<16x128xf32>
      %c0_17 = arith.constant 0 : index
      %c0_18 = arith.constant 0 : index
      %26 = vector.load %arg8[%c0_17, %c0_18] : memref<16x128xf32, #tpu.memory_space<vmem>>, vector<16x128xf32>
      tpu.vector_store %arg8[%c0_17, %c0_18], %25 {strides = array<i32>} : memref<16x128xf32, #tpu.memory_space<vmem>>, vector<16x128xf32>,
    } else {
    }
    %c0 = arith.constant 0 : index
    %c0_1 = arith.constant 0 : index
    %3 = vector.load %arg2[%c0, %c0_1] : memref<16x128xbf16, #tpu.memory_space<vmem>>, vector<16x128xbf16>
    %c0_2 = arith.constant 0 : index
    %c0_3 = arith.constant 0 : index
    %4 = vector.load %arg3[%c0_2, %c0_3] : memref<128x128xbf16, #tpu.memory_space<vmem>>, vector<128x128xbf16>
    %cst = arith.constant dense<0.000000e+00> : vector<16x128xf32>
    %5 = tpu.matmul %3, %4, %cst {dimension_numbers = #tpu.dot_dimension_numbers<[1], [0], [0], [1], [0, 0, 1, 1], [], []>} : vector<16x128xbf16>, vector<128x128xbf16>, vector<16x128xf32> -> vector<16x128xf32>
    %6 = arith.truncf %5 : vector<16x128xf32> to vector<16x128xbf16>
    %c0_4 = arith.constant 0 : index
    %c0_5 = arith.constant 0 : index
    %7 = vector.load %arg4[%c0_4, %c0_5] : memref<1x128xf32, #tpu.memory_space<vmem>>, vector<1x128xf32>
    %8 = arith.truncf %7 : vector<1x128xf32> to vector<1x128xbf16>
    %9 = vector.broadcast %8 : vector<1x128xbf16> to vector<16x128xbf16>
    %10 = arith.addf %6, %9 : vector<16x128xbf16>
    %11 = arith.negf %10 : vector<16x128xbf16>
    %12 = math.exp %11 : vector<16x128xbf16>
    %cst_6 = arith.constant 1.000000e+00 : bf16
    %13 = vector.broadcast %cst_6 : bf16 to vector<16x128xbf16>
    %14 = arith.addf %13, %12 : vector<16x128xbf16>
    %15 = arith.divf %13, %14 : vector<16x128xbf16>
    %16 = arith.mulf %10, %15 : vector<16x128xbf16>
    %c0_7 = arith.constant 0 : index
    %c0_8 = arith.constant 0 : index
    %17 = vector.load %arg8[%c0_7, %c0_8] : memref<16x128xf32, #tpu.memory_space<vmem>>, vector<16x128xf32>
    %c0_9 = arith.constant 0 : index
    %c0_10 = arith.constant 0 : index
    %18 = vector.load %arg5[%c0_9, %c0_10] : memref<128x128xbf16, #tpu.memory_space<vmem>>, vector<128x128xbf16>
    %cst_11 = arith.constant dense<0.000000e+00> : vector<16x128xf32>
    %19 = tpu.matmul %16, %18, %cst_11 {dimension_numbers = #tpu.dot_dimension_numbers<[1], [0], [0], [1], [0, 0, 1, 1], [], []>} : vector<16x128xbf16>, vector<128x128xbf16>, vector<16x128xf32> -> vector<16x128xf32>
    %20 = arith.addf %17, %19 : vector<16x128xf32>
    %c0_12 = arith.constant 0 : index
    %c0_13 = arith.constant 0 : index
    %21 = vector.load %arg8[%c0_12, %c0_13] : memref<16x128xf32, #tpu.memory_space<vmem>>, vector<16x128xf32>
    tpu.vector_store %arg8[%c0_12, %c0_13], %20 {strides = array<i32>} : memref<16x128xf32, #tpu.memory_space<vmem>>, vector<16x128xf32>,
    %c0_i32_14 = arith.constant 0 : i32
    %22 = arith.cmpi eq, %arg1, %c0_i32_14 : i32
    %23 = arith.extui %22 : i1 to i32
    %c0_i32_15 = arith.constant 0 : i32
    %24 = arith.cmpi ne, %23, %c0_i32_15 : i32
    scf.if %24 {
      %c0_16 = arith.constant 0 : index
      %c0_17 = arith.constant 0 : index
      %25 = vector.load %arg8[%c0_16, %c0_17] : memref<16x128xf32, #tpu.memory_space<vmem>>, vector<16x128xf32>
      %c0_18 = arith.constant 0 : index
      %c0_19 = arith.constant 0 : index
      %26 = vector.load %arg6[%c0_18, %c0_19] : memref<1x128xf32, #tpu.memory_space<vmem>>, vector<1x128xf32>
      %27 = vector.broadcast %26 : vector<1x128xf32> to vector<16x128xf32>
      %28 = arith.addf %25, %27 : vector<16x128xf32>
      %c0_20 = arith.constant 0 : index
      %c0_21 = arith.constant 0 : index
      %29 = vector.load %arg7[%c0_20, %c0_21] : memref<16x128xf32, #tpu.memory_space<vmem>>, vector<16x128xf32>
      tpu.vector_store %arg7[%c0_20, %c0_21], %28 {strides = array<i32>} : memref<16x128xf32, #tpu.memory_space<vmem>>, vector<16x128xf32>,
    } else {
    }
    return
  }
  func.func @transform_0(%arg0: i32, %arg1: i32) -> (i32, i32) {
    %c0_i32 = arith.constant 0 : i32
    %c0_i32_0 = arith.constant 0 : i32
    return %arg0, %c0_i32 : i32, i32
  }
  func.func @transform_1(%arg0: i32, %arg1: i32) -> (i32, i32) {
    %c0_i32 = arith.constant 0 : i32
    %c0_i32_0 = arith.constant 0 : i32
    return %c0_i32, %arg1 : i32, i32
  }
  func.func @transform_2(%arg0: i32, %arg1: i32) -> (i32, i32) {
    %c0_i32 = arith.constant 0 : i32
    %c0_i32_0 = arith.constant 0 : i32
    return %c0_i32, %arg1 : i32, i32
  }
  func.func @transform_3(%arg0: i32, %arg1: i32) -> (i32, i32) {
    %c0_i32 = arith.constant 0 : i32
    %c0_i32_0 = arith.constant 0 : i32
    return %arg1, %c0_i32 : i32, i32
  }
  func.func @transform_4(%arg0: i32, %arg1: i32) -> (i32, i32) {
    %c0_i32 = arith.constant 0 : i32
    %c0_i32_0 = arith.constant 0 : i32
    %c0_i32_1 = arith.constant 0 : i32
    return %c0_i32, %c0_i32_0 : i32, i32
  }
  func.func @transform_5(%arg0: i32, %arg1: i32) -> (i32, i32) {
    %c0_i32 = arith.constant 0 : i32
    %c0_i32_0 = arith.constant 0 : i32
    return %arg0, %c0_i32 : i32, i32
  }
}

</mosaic_0001>

<llo_original>
// kernel: _ffn_impl.1
$region0: #{_ffn_impl.1}
  #allocation0 [shape = 'u32[]', space=smem, size = 0x4, offset = 0x4, fixed_abs, tag = 'smem constant byte address 0x4 - core index']
  #allocation1 [shape = 'u32[72,128]{1,0:T(1,128)}', space=vmem, size = 0x9000, scoped, tag = 'internal scratch']
  #allocation2 [shape = 'f32[16,128]{1,0:T(8,128)}', space=vmem, size = 0x2000, scoped, tag = 'scratch operand']
  %s0 = inlined_call_operand.vmem [shape: bf16[16,128], index: 0, kind: input, shape index: {}]
  %s1 = inlined_call_operand.hbm [shape: bf16[128,128], index: 1, kind: input, shape index: {}]
  %s2 = inlined_call_operand.vmem [shape: f32[1,128], index: 2, kind: input, shape index: {}]
  %s3 = inlined_call_operand.hbm [shape: bf16[128,128], index: 3, kind: input, shape index: {}]
  %s4 = inlined_call_operand.vmem [shape: f32[1,128], index: 4, kind: input, shape index: {}]
  %s5 = inlined_call_operand.vmem [shape: f32[16,128], index: 5, kind: output, shape index: {}]
  %s6 = sld [smem:[#allocation0]]
  $region46: #{_ffn_impl.1} parent=0
    _
  %s8 = ssub.s32 1, %s6
  %s9 = scalar_select 0, %s8, %s6
  $region1: #{_ffn_impl.1} parent=0
    #allocation3 [shape = 'u8[32768]{0}', space=vmem, size = 0x8000, scoped, tag = 'input window, operand 1, single buffered']
    #allocation4 [shape = 's32[1]{0}', space=sflag, size = 0x4, scoped, tag = 'scoped memory for _ffn_impl.1']
    #allocation5 [shape = 'u8[32768]{0}', space=vmem, size = 0x8000, scoped, tag = 'input window, operand 3, single buffered']
    #allocation6 [shape = 's32[1]{0}', space=sflag, size = 0x4, scoped, tag = 'scoped memory for _ffn_impl.1']
    %10 = vsyncpa [#allocation4], 0
    %11 = vsyncpa [#allocation6], 0
    // Predicated region
    $region2: #{_ffn_impl.1} parent=1 // pred_check
      _
    $region3: #{_ffn_impl.1} parent=1 // pred_check_branch
      %13 = sbr.rel (0) target = $region5
    $region4: #{_ffn_impl.1} parent=1 // pred_region
      _
    $region5: #{_ffn_impl.1} parent=1 // pred_fallthru
      _
    // Predicated region
    $region6: #{_ffn_impl.1} parent=1 // pred_check
      _
    $region7: #{_ffn_impl.1} parent=1 // pred_check_branch
      %15 = sbr.rel (0) target = $region9
    $region8: #{_ffn_impl.1} parent=1 // pred_region
      %17 = vsyncadd [#allocation4], 0
      %s18 = sshll.u32 %s1, 4
      %s19 = int_to_ptr.hbm [resolvable:$true] %s18
      %s20 = sshll.u32 [#allocation3], 4
      %s21 = int_to_ptr.vmem [resolvable:$true] %s20
      %26 = dma.hbm_to_vmem [thread:$0]  %s19, 1024, %s21, [#allocation4], 64, 64, 4
    $region9: #{_ffn_impl.1} parent=1 // pred_fallthru
      _
    // Predicated region
    $region10: #{_ffn_impl.1} parent=1 // pred_check
      _
    $region11: #{_ffn_impl.1} parent=1 // pred_check_branch
      %28 = sbr.rel (0) target = $region13
    $region12: #{_ffn_impl.1} parent=1 // pred_region
      _
    $region13: #{_ffn_impl.1} parent=1 // pred_fallthru
      _
    // Predicated region
    $region14: #{_ffn_impl.1} parent=1 // pred_check
      _
    $region15: #{_ffn_impl.1} parent=1 // pred_check_branch
      %30 = sbr.rel (0) target = $region17
    $region16: #{_ffn_impl.1} parent=1 // pred_region
      %32 = vsyncadd [#allocation6], 0
      %s33 = sshll.u32 %s3, 4
      %s34 = int_to_ptr.hbm [resolvable:$true] %s33
      %s35 = sshll.u32 [#allocation5], 4
      %s36 = int_to_ptr.vmem [resolvable:$true] %s35
      %41 = dma.hbm_to_vmem [thread:$0]  %s34, 1024, %s36, [#allocation6], 64, 64, 4
    $region17: #{_ffn_impl.1} parent=1 // pred_fallthru
      _
    // Predicated region
    $region18: #{_ffn_impl.1} parent=1 // pred_check
      _
    $region19: #{_ffn_impl.1} parent=1 // pred_check_branch
      %43 = sbr.rel (0) target = $region21
    $region20: #{_ffn_impl.1} parent=1 // pred_region
      _
    $region21: #{_ffn_impl.1} parent=1 // pred_fallthru
      _
    // Predicated region
    $region22: #{_ffn_impl.1} parent=1 // pred_check
      _
    $region23: #{_ffn_impl.1} parent=1 // pred_check_branch
      %45 = sbr.rel (0) target = $region25
    $region24: #{_ffn_impl.1} parent=1 // pred_region
      %47 = dma.done [#allocation4], 1024
    $region25: #{_ffn_impl.1} parent=1 // pred_fallthru
      _
    // Predicated region
    $region26: #{_ffn_impl.1} parent=1 // pred_check
      _
    $region27: #{_ffn_impl.1} parent=1 // pred_check_branch
      %49 = sbr.rel (0) target = $region29
    $region28: #{_ffn_impl.1} parent=1 // pred_region
      %51 = dma.done [#allocation6], 1024
    $region29: #{_ffn_impl.1} parent=1 // pred_fallthru
      _
    %p53 = scmp.eq.s32.totalorder 0, 0
    // Predicated region
    $region30: #{_ffn_impl.1} parent=1 // pred_check
      %p54 = pneg %p53
    $region31: #{_ffn_impl.1} parent=1 // pred_check_branch
      %56 = sbr.rel (%p54) target = $region33
    $region32: #{_ffn_impl.1} parent=1 // pred_region
      %57 = vst [vmem:[#allocation2] sm:$0xff] 0.0
      %58 = vst [vmem:[#allocation2 + $0x8] sm:$0xff] 0.0
    $region33: #{_ffn_impl.1} parent=1 // pred_fallthru
      _
    %v59 = vld [vmem:[%s0] sm:$0xf]
    %v60 = vld [vmem:[%s0 + $0x4] sm:$0xf]
    %v61 = vld [vmem:[#allocation3] sm:$0xf]
    %v62 = vld [vmem:[#allocation3 + $0x4] sm:$0xf]
    %v63 = vld [vmem:[#allocation3 + $0x8] sm:$0xf]
    %v64 = vld [vmem:[#allocation3 + $0xc] sm:$0xf]
    %v65 = vld [vmem:[#allocation3 + $0x10] sm:$0xf]
    %v66 = vld [vmem:[#allocation3 + $0x14] sm:$0xf]
    %v67 = vld [vmem:[#allocation3 + $0x18] sm:$0xf]
    %v68 = vld [vmem:[#allocation3 + $0x1c] sm:$0xf]
    %v69 = vld [vmem:[#allocation3 + $0x20] sm:$0xf]
    %v70 = vld [vmem:[#allocation3 + $0x24] sm:$0xf]
    %v71 = vld [vmem:[#allocation3 + $0x28] sm:$0xf]
    %v72 = vld [vmem:[#allocation3 + $0x2c] sm:$0xf]
    %v73 = vld [vmem:[#allocation3 + $0x30] sm:$0xf]
    %v74 = vld [vmem:[#allocation3 + $0x34] sm:$0xf]
    %v75 = vld [vmem:[#allocation3 + $0x38] sm:$0xf]
    %v76 = vld [vmem:[#allocation3 + $0x3c] sm:$0xf]
    %v79 = vunpack.c.l.b16 %v59
    %v80 = vunpack.c.l.b16 %v60
    %v81 = vpack.c.b16 %v80, %v79
    %v99 = vunpack.c.l.b16 %v61
    %v100 = vunpack.c.l.b16 %v62
    %v101 = vunpack.c.l.b16 %v63
    %v102 = vunpack.c.l.b16 %v64
    %v103 = vunpack.c.l.b16 %v65
    %v104 = vunpack.c.l.b16 %v66
    %v105 = vunpack.c.l.b16 %v67
    %v106 = vunpack.c.l.b16 %v68
    %v107 = vunpack.c.l.b16 %v69
    %v108 = vunpack.c.l.b16 %v70
    %v109 = vunpack.c.l.b16 %v71
    %v110 = vunpack.c.l.b16 %v72
    %v111 = vunpack.c.l.b16 %v73
    %v112 = vunpack.c.l.b16 %v74
    %v113 = vunpack.c.l.b16 %v75
    %v114 = vunpack.c.l.b16 %v76
    %v115 = vpack.c.b16 %v100, %v99
    %v116 = vpack.c.b16 %v102, %v101
    %v117 = vpack.c.b16 %v104, %v103
    %v118 = vpack.c.b16 %v106, %v105
    %v119 = vpack.c.b16 %v108, %v107
    %v120 = vpack.c.b16 %v110, %v109
    %v121 = vpack.c.b16 %v112, %v111
    %v122 = vpack.c.b16 %v114, %v113
    %131 = vmatpush.bf16.msra.mxu0 %v122
    %132 = vmatpush.bf16.msra.mxu0 %v121
    %133 = vmatpush.bf16.msra.mxu0 %v120
    %134 = vmatpush.bf16.msra.mxu0 %v119
    %135 = vmatpush.bf16.msra.mxu0 %v118
    %136 = vmatpush.bf16.msra.mxu0 %v117
    %137 = vmatpush.bf16.msra.mxu0 %v116
    %138 = vmatpush.bf16.msra.mxu0 %v115
    %139 = vmatmul.bf16.gmra.mxu0 %v81
    %v140 = vpop.f32.mrf.mxu0
    %v141 = vadd.f32 0.0, %v140
    %v142 = vpop.f32.mrf.mxu0
    %v143 = vadd.f32 0.0, %v142
    %144 = vdwg.mxu0
    %v145 = vpack.c.bf16 %v141, %v141
    %v146 = vpack.c.bf16 %v143, %v143
    %v147 = vld [vmem:[%s2] sm:$0x1]
    %v148 = vpack.c.bf16 %v147, %v147
    %v150 = vpack.i.b16 %v148, %v148
    %v152 = vperm.slane %v150, 0
    %v153 = vunpack.c.l.bf16 %v145
    %v154 = vunpack.c.l.bf16 %v146
    %v155 = vunpack.c.l.bf16 %v152
    %v156 = vadd.f32 %v153, %v155
    %v157 = vadd.f32 %v154, %v155
    %v158 = vpack.c.bf16 %v156, %v156
    %v159 = vpack.c.bf16 %v157, %v157
    %v160 = vxor.u32 %v158, 2147516416
    %v161 = vxor.u32 %v159, 2147516416
    %v162 = vunpack.c.l.bf16 %v160
    %v163 = vunpack.c.l.bf16 %v161
    %v164 = vmul.f32 %v162, 1.442695
    %v165 = vpow.pop %v164
    %v166 = vmul.f32 %v163, 1.442695
    %v167 = vpow.pop %v166
    %v168 = vpack.c.bf16 %v165, %v165
    %v169 = vpack.c.bf16 %v167, %v167
    %v170 = vunpack.c.l.bf16 %v168
    %v171 = vunpack.c.l.bf16 %v169
    %v172 = vadd.f32 %v170, 1.0
    %v173 = vadd.f32 %v171, 1.0
    %v174 = vpack.c.bf16 %v172, %v172
    %v175 = vpack.c.bf16 %v173, %v173
    %v176 = vunpack.c.h.bf16 1065369472
    %v177 = vunpack.c.l.bf16 1065369472
    %v178 = vunpack.c.h.bf16 %v174
    %v179 = vunpack.c.l.bf16 %v174
    %v180 = vrcp.pop %v178
    %v181 = vmul.f32 %v176, %v180
    %v182 = vrcp.pop %v179
    %v183 = vmul.f32 %v177, %v182
    %v184 = vpack.c.bf16 %v181, %v183
    %v185 = vunpack.c.h.bf16 %v175
    %v186 = vunpack.c.l.bf16 %v175
    %v187 = vrcp.pop %v185
    %v188 = vmul.f32 %v176, %v187
    %v189 = vrcp.pop %v186
    %v190 = vmul.f32 %v177, %v189
    %v191 = vpack.c.bf16 %v188, %v190
    %v192 = vunpack.c.l.bf16 %v158
    %v193 = vunpack.c.l.bf16 %v159
    %v194 = vunpack.c.l.bf16 %v184
    %v195 = vunpack.c.l.bf16 %v191
    %v196 = vmul.f32 %v192, %v194
    %v197 = vmul.f32 %v193, %v195
    %v198 = vpack.c.bf16 %v197, %v196
    %v199 = vld [vmem:[#allocation2] sm:$0xff]
    %v200 = vld [vmem:[#allocation2 + $0x8] sm:$0xff]
    %v201 = vld [vmem:[#allocation5] sm:$0xf]
    %v202 = vld [vmem:[#allocation5 + $0x4] sm:$0xf]
    %v203 = vld [vmem:[#allocation5 + $0x8] sm:$0xf]
    %v204 = vld [vmem:[#allocation5 + $0xc] sm:$0xf]
    %v205 = vld [vmem:[#allocation5 + $0x10] sm:$0xf]
    %v206 = vld [vmem:[#allocation5 + $0x14] sm:$0xf]
    %v207 = vld [vmem:[#allocation5 + $0x18] sm:$0xf]
    %v208 = vld [vmem:[#allocation5 + $0x1c] sm:$0xf]
    %v209 = vld [vmem:[#allocation5 + $0x20] sm:$0xf]
    %v210 = vld [vmem:[#allocation5 + $0x24] sm:$0xf]
    %v211 = vld [vmem:[#allocation5 + $0x28] sm:$0xf]
    %v212 = vld [vmem:[#allocation5 + $0x2c] sm:$0xf]
    %v213 = vld [vmem:[#allocation5 + $0x30] sm:$0xf]
    %v214 = vld [vmem:[#allocation5 + $0x34] sm:$0xf]
    %v215 = vld [vmem:[#allocation5 + $0x38] sm:$0xf]
    %v216 = vld [vmem:[#allocation5 + $0x3c] sm:$0xf]
    %v233 = vunpack.c.l.b16 %v201
    %v234 = vunpack.c.l.b16 %v202
    %v235 = vunpack.c.l.b16 %v203
    %v236 = vunpack.c.l.b16 %v204
    %v237 = vunpack.c.l.b16 %v205
    %v238 = vunpack.c.l.b16 %v206
    %v239 = vunpack.c.l.b16 %v207
    %v240 = vunpack.c.l.b16 %v208
    %v241 = vunpack.c.l.b16 %v209
    %v242 = vunpack.c.l.b16 %v210
    %v243 = vunpack.c.l.b16 %v211
    %v244 = vunpack.c.l.b16 %v212
    %v245 = vunpack.c.l.b16 %v213
    %v246 = vunpack.c.l.b16 %v214
    %v247 = vunpack.c.l.b16 %v215
    %v248 = vunpack.c.l.b16 %v216
    %v249 = vpack.c.b16 %v234, %v233
    %v250 = vpack.c.b16 %v236, %v235
    %v251 = vpack.c.b16 %v238, %v237
    %v252 = vpack.c.b16 %v240, %v239
    %v253 = vpack.c.b16 %v242, %v241
    %v254 = vpack.c.b16 %v244, %v243
    %v255 = vpack.c.b16 %v246, %v245
    %v256 = vpack.c.b16 %v248, %v247
    %265 = vmatpush.bf16.msra.mxu0 %v256
    %266 = vmatpush.bf16.msra.mxu0 %v255
    %267 = vmatpush.bf16.msra.mxu0 %v254
    %268 = vmatpush.bf16.msra.mxu0 %v253
    %269 = vmatpush.bf16.msra.mxu0 %v252
    %270 = vmatpush.bf16.msra.mxu0 %v251
    %271 = vmatpush.bf16.msra.mxu0 %v250
    %272 = vmatpush.bf16.msra.mxu0 %v249
    %273 = vmatmul.bf16.gmra.mxu0 %v198
    %v274 = vpop.f32.mrf.mxu0
    %v275 = vadd.f32 0.0, %v274
    %v276 = vpop.f32.mrf.mxu0
    %v277 = vadd.f32 0.0, %v276
    %278 = vdwg.mxu0
    %v279 = vadd.f32 %v199, %v275
    %v280 = vadd.f32 %v200, %v277
    %281 = vst [vmem:[#allocation2] sm:$0xff] %v279
    %282 = vst [vmem:[#allocation2 + $0x8] sm:$0xff] %v280
    // Predicated region
    $region34: #{_ffn_impl.1} parent=1 // pred_check
      %p283 = pneg %p53
    $region35: #{_ffn_impl.1} parent=1 // pred_check_branch
      %285 = sbr.rel (%p283) target = $region37
    $region36: #{_ffn_impl.1} parent=1 // pred_region
      %v286 = vld [vmem:[#allocation2] sm:$0xff]
      %v287 = vld [vmem:[#allocation2 + $0x8] sm:$0xff]
      %v288 = vld [vmem:[%s4] sm:$0x1]
      %v290 = vperm.slane %v288, 0
      %v292 = vadd.f32 %v286, %v290
      %v293 = vadd.f32 %v287, %v290
      %294 = vst [vmem:[%s5] sm:$0xff] %v292
      %295 = vst [vmem:[%s5 + $0x8] sm:$0xff] %v293
    $region37: #{_ffn_impl.1} parent=1 // pred_fallthru
      _
    // Predicated region
    $region38: #{_ffn_impl.1} parent=1 // pred_check
      _
    $region39: #{_ffn_impl.1} parent=1 // pred_check_branch
      %297 = sbr.rel (0) target = $region41
    $region40: #{_ffn_impl.1} parent=1 // pred_region
      _
    $region41: #{_ffn_impl.1} parent=1 // pred_fallthru
      _
    // Predicated region
    $region42: #{_ffn_impl.1} parent=1 // pred_check
      _
    $region43: #{_ffn_impl.1} parent=1 // pred_check_branch
      %299 = sbr.rel (0) target = $region45
    $region44: #{_ffn_impl.1} parent=1 // pred_region
      _
    $region45: #{_ffn_impl.1} parent=1 // pred_fallthru
      _
    %300 = vsyncpa [#allocation4], 1
    %301 = vsyncpa [#allocation6], 1

</llo_original>
